<compile_context>
chip_gen: v6e
topology: v6e:2x2x1
jax: 0.10.0
libtpu: 0.0.40
codegen_flags: <defaults>
</compile_context>

<pallas_src>
import functools

import jax
import jax.numpy as jnp
from jax.experimental import pallas as pl
from jax.experimental.pallas import tpu as pltpu


def _round_up(a, b):
    return -(-a // b) * b


def _pick_lane_block(n_lanes, bytes_per_lane, vmem_budget=16 * 1024 * 1024):
    """Lane-block size TN: multiple of 128, VMEM-safe, >=2 grid steps if possible."""
    n128 = _round_up(n_lanes, 128)
    if n128 <= 256:
        return n128
    # Double-buffered input+output tiles must stay well under the scoped VMEM
    # limit (budget chosen so it also fits v7x's 64 MiB physical VMEM).
    cap = max(128, (vmem_budget // max(bytes_per_lane, 1)) // 128 * 128)
    # Keep at least 2 grid steps (v7x has 2 TensorCores) and cap block width.
    tn = min(cap, 16384, (n128 // 2 // 128) * 128)
    return max(128, tn)


def _conv1d_deriv_kernel(w_ref, x_ref, out_ref, *, K, Lout):
    """One grid step = TN time-series columns (lanes = batch rows).

    w_ref:   (K,)        scaled filter taps (already divided by resol), SMEM
    x_ref:   (L,   TN)   input block, VMEM
    out_ref: (Lout, TN)  output block, VMEM
    """
    acc = w_ref[0] * x_ref[0:Lout, :].astype(jnp.float32)
    for k in range(1, K):  # K is tiny (3); unrolled at trace time
        acc = acc + w_ref[k] * x_ref[k:k + Lout, :].astype(jnp.float32)
    out_ref[...] = acc.astype(out_ref.dtype)


def conv1d_derivative(x, der_filter, resol):
    """Equivalent of Conv1dDerivative.forward.

    x:          (N, 1, L) float32   (nn.Conv1d NCL input, 1 channel)
    der_filter: (1, 1, K) float32   (nn.Conv1d OIW weight, e.g. [[[-1, 0, 1]]])
    resol:      python float
    returns:    (N, 1, L - K + 1) float32
    """
    N, C, L = x.shape
    assert C == 1
    K = der_filter.shape[-1]
    Lout = L - (K - 1)
    assert Lout >= 1

    # Fold 1/resol into the taps: (w/resol) (x) x == (w (x) x) / resol.
    w = der_filter.reshape((K,)).astype(jnp.float32) * jnp.float32(1.0 / float(resol))

    # Re-layout so the big N axis sits on the 128-wide lanes: (N, L) -> (L, N).
    xt = x.reshape(N, L).T

    itemsize = jnp.dtype(x.dtype).itemsize
    TN = _pick_lane_block(N, 2 * (L + Lout) * itemsize)
    Npad = _round_up(N, TN)
    if Npad != N:
        xt = jnp.pad(xt, ((0, 0), (0, Npad - N)))

    kernel = functools.partial(_conv1d_deriv_kernel, K=K, Lout=Lout)

    out_t = pl.pallas_call(
        kernel,
        out_shape=jax.ShapeDtypeStruct((Lout, Npad), x.dtype),
        grid=(Npad // TN,),
        in_specs=[
            # flat (K,) stencil in SMEM, read as scalars
            pl.BlockSpec(memory_space=pltpu.MemorySpace.SMEM),
            # TN lane-wide column block; L (sublane) dim equals the full array dim
            pl.BlockSpec((L, TN), lambda n: (0, n)),
        ],
        out_specs=pl.BlockSpec((Lout, TN), lambda n: (0, n)),
        compiler_params=pltpu.CompilerParams(
            dimension_semantics=("parallel",)),
    )(w, xt)

    # Drop pad lanes and restore the (N, 1, Lout) layout of nn.Conv1d.
    return out_t[:, :N].T.reshape(N, 1, Lout)


if __name__ == "__main__":
    key = jax.random.PRNGKey(0)
    # Typical use: time derivative of a field u(t, x, y); rows = batch*H*W
    # flattened "pixels", L = number of time steps.
    batch, H, W, T = 2, 16, 16, 10
    N = batch * H * W
    x = jax.random.normal(key, (N, 1, T), dtype=jnp.float32)

    # partial_t stencil [[[-1, 0, 1]]] in Conv1d OIW weight shape, resol = 2*dt.
    der_filter = jnp.array([[[-1.0, 0.0, 1.0]]], dtype=jnp.float32)
    dt = 0.002
    resol = 2.0 * dt

    out = jax.block_until_ready(conv1d_derivative(x, der_filter, resol))

    # Pure-JAX reference: VALID cross-correlation (== nn.Conv1d, padding=0), then /resol.
    ref = jax.lax.conv_general_dilated(
        x, der_filter, window_strides=(1,), padding="VALID",
        dimension_numbers=("NCH", "OIH", "NCH")) / resol

    assert out.shape == (N, 1, T - 2)
    assert jnp.allclose(out, ref, atol=1e-3, rtol=1e-4), \
        float(jnp.max(jnp.abs(out - ref)))
    print("KERNEL_OK")
</pallas_src>

<mosaic_0001>
module attributes {stable_mosaic.version = 11 : i64} {
  func.func @_conv1d_deriv_kernel(%arg0: i32, %arg1: memref<3xf32, #tpu.memory_space<smem>>, %arg2: memref<10x256xf32, #tpu.memory_space<vmem>>, %arg3: memref<8x256xf32, #tpu.memory_space<vmem>>) attributes {dimension_semantics = [#tpu.dimension_semantics<parallel>], iteration_bounds = array<i64: 2>, scalar_prefetch = 0 : i64, scratch_operands = 0 : i64, tpu.core_type = #tpu.core_type<tc>, window_params = [{transform_indices = @transform_0, window_bounds = array<i64: 3>}, {transform_indices = @transform_1, window_bounds = array<i64: 10, 256>}, {transform_indices = @transform_2, window_bounds = array<i64: 8, 256>}]} {
    %c0 = arith.constant 0 : index
    %0 = memref.load %arg1[%c0] : memref<3xf32, #tpu.memory_space<smem>>
    %c0_0 = arith.constant 0 : index
    %c0_1 = arith.constant 0 : index
    %1 = vector.load %arg2[%c0_0, %c0_1] : memref<10x256xf32, #tpu.memory_space<vmem>>, vector<8x256xf32>
    %2 = vector.broadcast %0 : f32 to vector<8x256xf32>
    %3 = arith.mulf %2, %1 : vector<8x256xf32>
    %c1 = arith.constant 1 : index
    %4 = memref.load %arg1[%c1] : memref<3xf32, #tpu.memory_space<smem>>
    %c1_2 = arith.constant 1 : index
    %c0_3 = arith.constant 0 : index
    %5 = vector.load %arg2[%c1_2, %c0_3] : memref<10x256xf32, #tpu.memory_space<vmem>>, vector<8x256xf32>
    %6 = vector.broadcast %4 : f32 to vector<8x256xf32>
    %7 = arith.mulf %6, %5 : vector<8x256xf32>
    %8 = arith.addf %3, %7 : vector<8x256xf32>
    %c2 = arith.constant 2 : index
    %9 = memref.load %arg1[%c2] : memref<3xf32, #tpu.memory_space<smem>>
    %c2_4 = arith.constant 2 : index
    %c0_5 = arith.constant 0 : index
    %10 = vector.load %arg2[%c2_4, %c0_5] : memref<10x256xf32, #tpu.memory_space<vmem>>, vector<8x256xf32>
    %11 = vector.broadcast %9 : f32 to vector<8x256xf32>
    %12 = arith.mulf %11, %10 : vector<8x256xf32>
    %13 = arith.addf %8, %12 : vector<8x256xf32>
    %c0_6 = arith.constant 0 : index
    %c0_7 = arith.constant 0 : index
    %14 = vector.load %arg3[%c0_6, %c0_7] : memref<8x256xf32, #tpu.memory_space<vmem>>, vector<8x256xf32>
    tpu.vector_store %arg3[%c0_6, %c0_7], %13 {strides = array<i32>} : memref<8x256xf32, #tpu.memory_space<vmem>>, vector<8x256xf32>,
    return
  }
  func.func @transform_0(%arg0: i32) -> i32 {
    %c0_i32 = arith.constant 0 : i32
    %c0_i32_0 = arith.constant 0 : i32
    return %c0_i32 : i32
  }
  func.func @transform_1(%arg0: i32) -> (i32, i32) {
    %c0_i32 = arith.constant 0 : i32
    %c0_i32_0 = arith.constant 0 : i32
    return %c0_i32, %arg0 : i32, i32
  }
  func.func @transform_2(%arg0: i32) -> (i32, i32) {
    %c0_i32 = arith.constant 0 : i32
    %c0_i32_0 = arith.constant 0 : i32
    return %c0_i32, %arg0 : i32, i32
  }
}

</mosaic_0001>

<llo_original>
// kernel: tpu_custom_call.1
$region0: #{tpu_custom_call.1}
  #allocation0 [shape = 'u32[]', space=smem, size = 0x4, offset = 0x4, fixed_abs, tag = 'smem constant byte address 0x4 - core index']
  #allocation1 [shape = 'u32[144,128]{1,0:T(1,128)}', space=vmem, size = 0x12000, scoped, tag = 'internal scratch']
  %s0 = inlined_call_operand.hbm [shape: f32[3], index: 0, kind: input, shape index: {}]
  %s1 = inlined_call_operand.hbm [shape: f32[10,512], index: 1, kind: input, shape index: {}]
  %s2 = inlined_call_operand.hbm [shape: f32[8,512], index: 2, kind: output, shape index: {}]
  %s3 = sld [smem:[#allocation0]]
  $region49: #{tpu_custom_call.1} parent=0
    _
  %s5 = ssub.s32 1, %s3
  %s6 = scalar_select 0, %s5, %s3
  $region1: #{tpu_custom_call.1} parent=0
    #allocation2 [shape = 'u8[512]{0}', space=smem, size = 0x200, scoped, tag = 'input window, operand 0, single buffered']
    #allocation3 [shape = 's32[2]{0}', space=sflag, size = 0x8, scoped, tag = 'scoped memory for tpu_custom_call.1']
    #allocation4 [shape = 's32[2]{0}', space=sflag, size = 0x8, scoped, tag = 'scoped memory for tpu_custom_call.1']
    #allocation5 [shape = 's32[2]{0}', space=sflag, size = 0x8, scoped, tag = 'scoped memory for tpu_custom_call.1']
    #allocation6 [shape = 'u8[32768]{0}', space=vmem, size = 0x8000, scoped, tag = 'input window, operand 1']
    #allocation7 [shape = 'u8[16384]{0}', space=vmem, size = 0x4000, scoped, tag = 'output window, operand 0']
    %7 = vsyncpa [#allocation5], 0
    %8 = vsyncpa [#allocation3], 0
    %s9 = scalar_lea.sflag [#allocation3], 1
    %10 = vsyncpa %s9, 0
    %11 = vsyncpa [#allocation4], 0
    %s12 = scalar_lea.sflag [#allocation4], 1
    %13 = vsyncpa %s12, 0
    loop: start=0, step=1, limit=4
    $region2: #{tpu_custom_call.1} parent=1 // loop_pre_header
      _
    $region3: #{tpu_custom_call.1} parent=1 // loop_header
      %s15 = sphi 0, %s19
      %p16 = scmp.ge.s32.totalorder %s15, 4
      %s23 = sphi 0, %s23
      %s25 = sphi 0, %s23
      %s26 = sphi 0, %s25
      %s40 = sphi 0, %s26
      %s46 = sphi 0, %s48
      %s49 = sphi 0, %s46
      %s50 = sphi 0, %s49
      %s66 = sphi 0, %s50
      %s72 = sphi 0, %s74
      %s75 = sphi 0, %s72
      %s76 = sphi 0, %s75
      %s92 = sphi 0, %s76
    $region4: #{tpu_custom_call.1} parent=1 // loop_header_branch
      %18 = sbr.rel (%p16) target = $region8
    $region5: #{tpu_custom_call.1} parent=1 // loop_body
      %s20 = ssub.s32 %s15, 1
      %s21 = ssub.s32 %s15, 2
      %s22 = sadd.s32 %s15, 1
      %s24 = sadd.s32 %s23, 1
      %p27 = scmp.eq.s32.totalorder %s15, 1
      %p28 = scmp.ne.s32.totalorder %s23, %s25
      %p29 = scmp.eq.s32.totalorder %s15, 0
      %p30 = por %p28, %p29
      %p31 = scmp.ne.s32.totalorder %s23, %s25
      %p32 = scmp.eq.s32.totalorder %s20, 1
      %p33 = por %p31, %p32
      %p34 = scmp.ne.s32.totalorder %s25, %s26
      %p35 = scmp.eq.s32.totalorder %s20, 0
      %p36 = por %p34, %p35
      %p37 = scmp.ne.s32.totalorder %s25, %s26
      %p38 = scmp.eq.s32.totalorder %s21, 1
      %p39 = por %p37, %p38
      %p41 = scmp.ne.s32.totalorder %s26, %s40
      %p42 = scmp.eq.s32.totalorder %s21, 0
      %p43 = por %p41, %p42
      %s44 = ssub.s32 %s15, %s22
      %p45 = scmp.eq.s32.totalorder %s44, 0
      %s47 = sadd.s32 %s46, 1
      %s48 = scalar_select %p45, %s46, %s47
      %p51 = pneg %p45
      %p52 = scmp.eq.s32.totalorder %s15, 1
      %p53 = por %p51, %p52
      %p54 = scmp.ne.s32.totalorder %s46, %s49
      %p55 = scmp.eq.s32.totalorder %s15, 0
      %p56 = por %p54, %p55
      %p57 = scmp.ne.s32.totalorder %s46, %s49
      %p58 = scmp.eq.s32.totalorder %s20, 1
      %p59 = por %p57, %p58
      %p60 = scmp.ne.s32.totalorder %s49, %s50
      %p61 = scmp.eq.s32.totalorder %s20, 0
      %p62 = por %p60, %p61
      %p63 = scmp.ne.s32.totalorder %s49, %s50
      %p64 = scmp.eq.s32.totalorder %s21, 1
      %p65 = por %p63, %p64
      %p67 = scmp.ne.s32.totalorder %s50, %s66
      %p68 = scmp.eq.s32.totalorder %s21, 0
      %p69 = por %p67, %p68
      %s70 = ssub.s32 %s15, %s22
      %p71 = scmp.eq.s32.totalorder %s70, 0
      %s73 = sadd.s32 %s72, 1
      %s74 = scalar_select %p71, %s72, %s73
      %p77 = pneg %p71
      %p78 = scmp.eq.s32.totalorder %s15, 1
      %p79 = por %p77, %p78
      %p80 = scmp.ne.s32.totalorder %s72, %s75
      %p81 = scmp.eq.s32.totalorder %s15, 0
      %p82 = por %p80, %p81
      %p83 = scmp.ne.s32.totalorder %s72, %s75
      %p84 = scmp.eq.s32.totalorder %s20, 1
      %p85 = por %p83, %p84
      %p86 = scmp.ne.s32.totalorder %s75, %s76
      %p87 = scmp.eq.s32.totalorder %s20, 0
      %p88 = por %p86, %p87
      %p89 = scmp.ne.s32.totalorder %s75, %s76
      %p90 = scmp.eq.s32.totalorder %s21, 1
      %p91 = por %p89, %p90
      %p93 = scmp.ne.s32.totalorder %s76, %s92
      %p94 = scmp.eq.s32.totalorder %s21, 0
      %p95 = por %p93, %p94
      %p96 = scmp.le.s32.totalorder 1, %s15
      %p97 = scmp.lt.s32.totalorder %s15, 3
      %p98 = pnand %p96, %p97
      %p99 = pneg %p98
      // Predicated region
      $region9: #{tpu_custom_call.1} parent=5 // pred_check
        _
      $region10: #{tpu_custom_call.1} parent=5 // pred_check_branch
        %101 = sbr.rel (%p98) target = $region12
      $region11: #{tpu_custom_call.1} parent=5 // pred_region
        %s102 = ssub.s32 %s15, 1
        // Predicated region
        $region13: #{tpu_custom_call.1} parent=11 // pred_check
          %p103 = pneg %p36
        $region14: #{tpu_custom_call.1} parent=11 // pred_check_branch
          %105 = sbr.rel (%p103) target = $region16
        $region15: #{tpu_custom_call.1} parent=11 // pred_region
          %s107 = ssub.s32 16, 16
          %108 = vsyncadd [#allocation5], %s107
          %111 = dma.hbm_to_smem %s0, 16, [#allocation2], [#allocation5]
        $region16: #{tpu_custom_call.1} parent=11 // pred_fallthru
          _
      $region12: #{tpu_custom_call.1} parent=5 // pred_fallthru
        _
      %p112 = scmp.lt.s32.totalorder %s15, 2
      // Predicated region
      $region17: #{tpu_custom_call.1} parent=5 // pred_check
        %p113 = pneg %p112
      $region18: #{tpu_custom_call.1} parent=5 // pred_check_branch
        %115 = sbr.rel (%p113) target = $region20
      $region19: #{tpu_custom_call.1} parent=5 // pred_region
        // Predicated region
        $region21: #{tpu_custom_call.1} parent=19 // pred_check
          %p116 = pneg %p56
        $region22: #{tpu_custom_call.1} parent=19 // pred_check_branch
          %118 = sbr.rel (%p116) target = $region24
        $region23: #{tpu_custom_call.1} parent=19 // pred_region
          %s119 = sand.u32 %s46, 1
          %s120 = scalar_lea.sflag [#allocation3], %s119
          %s121 = sand.u32 %s46, 1
          %s122 = smul.addr %s121, 32
          %s123 = scalar_lea.vmem [#allocation6], %s122
          %s124 = smul.u32 2, %s15
          %s126 = ssub.s32 512, 512
          %127 = vsyncadd %s120, %s126
          %s128 = smul.addr %s124, 128
          %s129 = scalar_lea.hbm %s1, %s128
          %s130 = sshll.u32 %s123, 4
          %s131 = int_to_ptr.vmem [resolvable:$true] %s130
          %136 = dma.hbm_to_vmem [thread:$0]  %s129, 512, %s131, %s120, 512, 256, 16
        $region24: #{tpu_custom_call.1} parent=19 // pred_fallthru
          _
      $region20: #{tpu_custom_call.1} parent=5 // pred_fallthru
        _
      %p137 = scmp.le.s32.totalorder 1, %s15
      %p138 = scmp.lt.s32.totalorder %s15, 3
      %p139 = pnand %p137, %p138
      %p140 = pneg %p139
      // Predicated region
      $region25: #{tpu_custom_call.1} parent=5 // pred_check
        _
      $region26: #{tpu_custom_call.1} parent=5 // pred_check_branch
        %142 = sbr.rel (%p139) target = $region28
      $region27: #{tpu_custom_call.1} parent=5 // pred_region
        %s143 = ssub.s32 %s15, 1
        // Predicated region
        $region29: #{tpu_custom_call.1} parent=27 // pred_check
          %p144 = pneg %p36
        $region30: #{tpu_custom_call.1} parent=27 // pred_check_branch
          %146 = sbr.rel (%p144) target = $region32
        $region31: #{tpu_custom_call.1} parent=27 // pred_region
          %147 = dma.done [#allocation5], 16
        $region32: #{tpu_custom_call.1} parent=27 // pred_fallthru
          _
        %s148 = sand.u32 %s49, 1
        %s149 = scalar_lea.sflag [#allocation3], %s148
        %s150 = sand.u32 %s49, 1
        %s151 = smul.addr %s150, 32
        %s152 = scalar_lea.vmem [#allocation6], %s151
        // Predicated region
        $region33: #{tpu_custom_call.1} parent=27 // pred_check
          %p153 = pneg %p62
        $region34: #{tpu_custom_call.1} parent=27 // pred_check_branch
          %155 = sbr.rel (%p153) target = $region36
        $region35: #{tpu_custom_call.1} parent=27 // pred_region
          %156 = dma.done %s149, 512
        $region36: #{tpu_custom_call.1} parent=27 // pred_fallthru
          _
        %157 = sfence
        %p158 = pneg %p36
        %p159 = pneg %p33
        %s160 = sand.u32 %s49, 1
        %s161 = scalar_lea.sflag [#allocation3], %s160
        %s162 = sand.u32 %s49, 1
        %s163 = smul.addr %s162, 32
        %s164 = scalar_lea.vmem [#allocation6], %s163
        %p165 = pneg %p62
        %p166 = pneg %p59
        %p167 = pneg %p88
        %p168 = pneg %p85
        %s169 = sand.u32 %s75, 1
        %s170 = scalar_lea.sflag [#allocation4], %s169
        %s171 = sand.u32 %s75, 1
        %s172 = smul.addr %s171, 16
        %s173 = scalar_lea.vmem [#allocation7], %s172
        %s174 = smul.u32 2, %s20
        %s175 = smul.u32 2, %s20
        %s176 = sld [smem:[#allocation2]]
        %v177 = vld [vmem:[%s152] sm:$0xff]
        %v178 = vld [vmem:[%s152 + $0x8] sm:$0xff]
        %v179 = vstv %s176
        %v180 = vmul.f32 %v179, %v177
        %v181 = vmul.f32 %v179, %v178
        %s182 = sld [smem:[#allocation2 + $0x1]]
        %v183 = vld [vmem:[%s152] sm:$0xfe]
        %v184 = vld [vmem:[%s152 + $0x8] sm:$0xfe]
        %v185 = vld [vmem:[%s152 + $0x10] sm:$0x1]
        %v186 = vld [vmem:[%s152 + $0x18] sm:$0x1]
        %v187 = vstv %s182
        %v188 = vmul.f32 %v187, %v183
        %v189 = vmul.f32 %v187, %v184
        %v190 = vmul.f32 %v187, %v185
        %v191 = vmul.f32 %v187, %v186
        %vm196 = vcmask 1046528
        %v197 = vrot.slane %v188, 1
        %v198 = vrot.slane %v190, 1
        %v199 = vsel %vm196, %v197, %v198
        %v200 = vrot.slane %v189, 1
        %v201 = vrot.slane %v191, 1
        %v202 = vsel %vm196, %v200, %v201
        %v205 = vadd.f32 %v180, %v199
        %v206 = vadd.f32 %v181, %v202
        %s207 = sld [smem:[#allocation2 + $0x2]]
        %v208 = vld [vmem:[%s152] sm:$0xfc]
        %v209 = vld [vmem:[%s152 + $0x8] sm:$0xfc]
        %v210 = vld [vmem:[%s152 + $0x10] sm:$0x3]
        %v211 = vld [vmem:[%s152 + $0x18] sm:$0x3]
        %v212 = vstv %s207
        %v213 = vmul.f32 %v212, %v208
        %v214 = vmul.f32 %v212, %v209
        %v215 = vmul.f32 %v212, %v210
        %v216 = vmul.f32 %v212, %v211
        %vm221 = vcmask 1045504
        %v222 = vrot.slane %v213, 2
        %v223 = vrot.slane %v215, 2
        %v224 = vsel %vm221, %v222, %v223
        %v225 = vrot.slane %v214, 2
        %v226 = vrot.slane %v216, 2
        %v227 = vsel %vm221, %v225, %v226
        %v230 = vadd.f32 %v205, %v224
        %v231 = vadd.f32 %v206, %v227
        %232 = vst [vmem:[%s173] sm:$0xff] %v230
        %233 = vst [vmem:[%s173 + $0x8] sm:$0xff] %v231
        %s234 = sand.u32 %s75, 1
        %s235 = scalar_lea.sflag [#allocation4], %s234
        %s236 = sand.u32 %s75, 1
        %s237 = smul.addr %s236, 16
        %s238 = scalar_lea.vmem [#allocation7], %s237
        // Predicated region
        $region37: #{tpu_custom_call.1} parent=27 // pred_check
          %p239 = pneg %p85
        $region38: #{tpu_custom_call.1} parent=27 // pred_check_branch
          %241 = sbr.rel (%p239) target = $region40
        $region39: #{tpu_custom_call.1} parent=27 // pred_region
          %s242 = smul.u32 2, %s20
          %s244 = ssub.s32 256, 256
          %245 = vsyncadd %s235, %s244
          %s246 = smul.addr %s242, 128
          %s247 = scalar_lea.hbm %s2, %s246
          %s249 = sshll.u32 %s238, 4
          %s250 = int_to_ptr.vmem [resolvable:$true] %s249
          %252 = dma.vmem_to_hbm [thread:$0]  %s250, 256, %s247, %s235
        $region40: #{tpu_custom_call.1} parent=27 // pred_fallthru
          _
      $region28: #{tpu_custom_call.1} parent=5 // pred_fallthru
        _
      %p253 = scmp.le.s32.totalorder 2, %s15
      // Predicated region
      $region41: #{tpu_custom_call.1} parent=5 // pred_check
        %p254 = pneg %p253
      $region42: #{tpu_custom_call.1} parent=5 // pred_check_branch
        %256 = sbr.rel (%p254) target = $region44
      $region43: #{tpu_custom_call.1} parent=5 // pred_region
        %s257 = ssub.s32 %s15, 2
        // Predicated region
        $region45: #{tpu_custom_call.1} parent=43 // pred_check
          %p258 = pneg %p91
        $region46: #{tpu_custom_call.1} parent=43 // pred_check_branch
          %260 = sbr.rel (%p258) target = $region48
        $region47: #{tpu_custom_call.1} parent=43 // pred_region
          %s261 = sand.u32 %s76, 1
          %s262 = scalar_lea.sflag [#allocation4], %s261
          %s263 = sand.u32 %s76, 1
          %s264 = smul.addr %s263, 16
          %s265 = scalar_lea.vmem [#allocation7], %s264
          %266 = dma.done %s262, 256
        $region48: #{tpu_custom_call.1} parent=43 // pred_fallthru
          _
      $region44: #{tpu_custom_call.1} parent=5 // pred_fallthru
        _
    $region6: #{tpu_custom_call.1} parent=1 // loop_footer
      %s19 = sadd.s32 1, %s15
    $region7: #{tpu_custom_call.1} parent=1 // loop_footer_branch
      %14 = sbr.rel target = $region3
    $region8: #{tpu_custom_call.1} parent=1 // loop_exit
      _
    %267 = vsyncpa [#allocation3], 1
    %s268 = scalar_lea.sflag [#allocation3], 1
    %269 = vsyncpa %s268, 1
    %270 = vsyncpa [#allocation4], 1
    %s271 = scalar_lea.sflag [#allocation4], 1
    %272 = vsyncpa %s271, 1
    %273 = vsyncpa [#allocation5], 1
    %s274 = scalar_lea.sflag [#allocation5], 1
    %275 = vsyncpa %s274, 1

</llo_original>
